<compile_context>
chip_gen: v7x
topology: tpu7x:2x2x1
jax: 0.10.0
libtpu: 0.0.40
codegen_flags: <defaults>
</compile_context>

<pallas_src>
import functools
import math

import jax
import jax.numpy as jnp
import numpy as np
from jax import lax
from jax.experimental import pallas as pl
from jax.experimental.pallas import tpu as pltpu


def _modulation_linear_kernel(x_ref, z_ref, mw_ref, mb_ref, w_ref, b_ref, o_ref,
                              *, demodulate, activate, add_bias, eps,
                              negative_slope):
    """One (cout tile, batch tile) per grid step, fully fused.

    x_ref : (TB, Cin)   input activations
    z_ref : (TB, Z)     latent codes
    mw_ref: (Z, Cin)    modulation weight, pre-scaled by 1/sqrt(Z), transposed (bf16)
    mb_ref: (1, Cin)    modulation bias (f32)
    w_ref : (Cin, TC)   main weight, pre-scaled (+demod, +act gain), transposed (bf16)
    b_ref : (1, TC)     output bias (act gain folded in, f32)
    o_ref : (TB, TC)    output
    """
    # gamma = EqualLinear(z): bf16 MXU matmul, f32 accumulation, bias add.
    gamma = jnp.dot(z_ref[...].astype(mw_ref.dtype), mw_ref[...],
                    preferred_element_type=jnp.float32) + mb_ref[...]
    xm = x_ref[...].astype(jnp.float32) * gamma

    if demodulate:
        # Per-row input demodulation in f32: cross-lane reduce (XLU) + rsqrt
        # (EUP) — both off the VALU critical path.
        inv = lax.rsqrt(jnp.sum(xm * xm, axis=-1, keepdims=True) + eps)
        xm = xm * inv

    # Main projection: one lane-dense (TB,Cin)x(Cin,TC) bf16 MXU matmul, f32 acc.
    out = jnp.dot(xm.astype(w_ref.dtype), w_ref[...],
                  preferred_element_type=jnp.float32)

    if activate:
        # FusedLeakyReLU; the sqrt(2) gain is already folded into w_ref/b_ref.
        out = out + b_ref[...]
        out = jnp.where(out >= 0, out, negative_slope * out)
    elif add_bias:
        out = out + b_ref[...]

    o_ref[...] = out.astype(o_ref.dtype)


def _round_up(v, m):
    return (v + m - 1) // m * m


# NOTE: eps is static (the module hardcodes eps=1e-8); changing it at runtime
# recompiles, which is acceptable for a fixed-hyperparameter layer.
@functools.partial(
    jax.jit,
    static_argnames=("demodulate", "activate", "add_bias", "eps",
                     "block_b", "block_c", "mxu_dtype", "out_dtype"))
def modulation_linear(x, z, weight, mod_weight, mod_bias, out_bias, *,
                      demodulate=True, activate=True, add_bias=True,
                      eps=1e-8, block_b=512, block_c=512,
                      mxu_dtype=jnp.bfloat16, out_dtype=None):
    """x: (N, Cin); z: (N, Z); weight: (Cout, Cin); mod_weight: (Cin, Z);
    mod_bias: (Cin,); out_bias: (Cout,) or None."""
    n, cin = x.shape
    cout, cin_w = weight.shape
    assert cin == cin_w
    zdim = z.shape[1]
    assert z.shape[0] == n and mod_weight.shape == (cin, zdim)
    out_dtype = x.dtype if out_dtype is None else out_dtype

    # ---- parameter glue (tiny, once per call, plain JAX under jit) ----------
    gain = math.sqrt(2.0) if activate else 1.0      # FusedLeakyReLU gain

    w = weight.astype(jnp.float32) * (1.0 / math.sqrt(cin))
    if demodulate:
        w = w * lax.rsqrt(jnp.sum(w * w, axis=1, keepdims=True) + eps)
    w_t = jnp.transpose(w * gain).astype(mxu_dtype)                  # (Cin, Cout)

    mw_t = jnp.transpose(
        mod_weight.astype(jnp.float32) * (1.0 / math.sqrt(zdim))
    ).astype(mxu_dtype)                                              # (Z, Cin)
    mb = mod_bias.astype(jnp.float32).reshape(1, cin)

    if out_bias is None:
        b2d = jnp.zeros((1, cout), jnp.float32)
    else:
        b2d = out_bias.astype(jnp.float32).reshape(1, cout) * gain

    # ---- tiling --------------------------------------------------------------
    # No host-side padding / trailing slice: Pallas handles the ragged last
    # batch block (garbage rows are dead; their stores are masked).
    tb = min(block_b, _round_up(n, 8))
    if cout <= block_c:
        tc = cout                       # single, fully lane-dense output tile
    else:
        tc = _round_up(block_c, 128)    # lane-dense cout tiles
    n_b = pl.cdiv(n, tb)
    n_c = pl.cdiv(cout, tc)

    # Single-buffer the grid-resident weight operands only when a
    # double-buffered tile would meaningfully pressure VMEM (v7x: 64 MiB).
    single_buf = cin * tc * np.dtype(mxu_dtype).itemsize > (2 << 20)

    def const_spec(shape, index_map):
        if single_buf:
            return pl.BlockSpec(shape, index_map, pipeline_mode=pl.Buffered(1))
        return pl.BlockSpec(shape, index_map)

    kernel = functools.partial(
        _modulation_linear_kernel,
        demodulate=demodulate, activate=activate, add_bias=add_bias,
        eps=eps, negative_slope=0.2)

    # Grid: (cout tiles, batch tiles) — both "parallel" (v7x megacore sharding);
    # cout is the outer axis so the weight tile only changes on the slow axis.
    out = pl.pallas_call(
        kernel,
        out_shape=jax.ShapeDtypeStruct((n, cout), out_dtype),
        grid_spec=pltpu.PrefetchScalarGridSpec(
            num_scalar_prefetch=0,
            grid=(n_c, n_b),
            in_specs=[
                pl.BlockSpec((tb, cin), lambda j, i: (i, 0)),      # x tile
                pl.BlockSpec((tb, zdim), lambda j, i: (i, 0)),     # z tile
                const_spec((zdim, cin), lambda j, i: (0, 0)),      # mod weight
                const_spec((1, cin), lambda j, i: (0, 0)),         # mod bias
                const_spec((cin, tc), lambda j, i: (0, j)),        # main weight
                const_spec((1, tc), lambda j, i: (0, j)),          # out bias
            ],
            out_specs=pl.BlockSpec((tb, tc), lambda j, i: (i, j)),
        ),
        compiler_params=pltpu.CompilerParams(
            dimension_semantics=("parallel", "parallel")),
    )(x, z, mw_t, mb, w_t, b2d)

    return out


def _reference(x, z, weight, mod_weight, mod_bias, out_bias, *,
               demodulate=True, activate=True, add_bias=True, eps=1e-8):
    """Pure-JAX (f32, HIGHEST precision) mirror of ModulationLinear.forward."""
    cout, cin = weight.shape
    zdim = mod_weight.shape[1]
    gamma = jnp.dot(z, (mod_weight * (1.0 / math.sqrt(zdim))).T,
                    precision=lax.Precision.HIGHEST) + mod_bias.reshape(1, -1)
    xin = x * gamma
    w = weight * (1.0 / math.sqrt(cin))
    if demodulate:
        demod = lax.rsqrt(jnp.sum(w * w, axis=1) + eps)
        w = w * demod[:, None]
        input_demod = lax.rsqrt(jnp.sum(xin * xin, axis=1) + eps)
        xin = xin * input_demod[:, None]
    out = jnp.dot(xin, w.T, precision=lax.Precision.HIGHEST)
    if activate:
        ob = out + out_bias.reshape(1, -1)
        out = jnp.where(ob >= 0, ob, 0.2 * ob) * math.sqrt(2.0)
    elif add_bias:
        out = out + out_bias.reshape(1, -1)
    return out


if __name__ == "__main__":
    # Small deterministic config; N=70 with block_b=32 exercises a multi-step
    # pipelined grid AND the ragged (unpadded) last batch block. 128-wide
    # channels keep the output lane-dense.
    N, Z, CIN, COUT = 70, 32, 128, 128

    key = jax.random.PRNGKey(0)
    kx, kz, kw, kmw, kb = jax.random.split(key, 5)
    x = jax.random.normal(kx, (N, CIN), dtype=jnp.float32)
    z = jax.random.normal(kz, (N, Z), dtype=jnp.float32)
    # nn.Parameter(torch.randn(out_channel, in_channel)) -> standard normal
    weight = jax.random.normal(kw, (COUT, CIN), dtype=jnp.float32)
    # EqualLinear(z_dim -> in_channel): randn(in_channel, z_dim), bias_init=1
    mod_weight = jax.random.normal(kmw, (CIN, Z), dtype=jnp.float32)
    mod_bias = jnp.ones((CIN,), dtype=jnp.float32)
    # FusedLeakyReLU bias (nonzero here to exercise the bias/gain folding)
    fused_bias = 0.1 * jax.random.normal(kb, (COUT,), dtype=jnp.float32)

    # Default path: demodulate + FusedLeakyReLU. Small batch tile -> 3 grid
    # steps, ragged tail handled without any host-side pad/slice.
    out = modulation_linear(x, z, weight, mod_weight, mod_bias, fused_bias,
                            demodulate=True, activate=True, add_bias=True,
                            block_b=32)
    out = jax.block_until_ready(out)
    ref = _reference(x, z, weight, mod_weight, mod_bias, fused_bias,
                     demodulate=True, activate=True, add_bias=True)
    # bf16 MXU inputs vs HIGHEST-precision f32 reference -> loosened tolerance.
    np.testing.assert_allclose(np.asarray(out), np.asarray(ref),
                               rtol=2e-2, atol=2e-2)
    assert out.shape == (N, COUT) and out.dtype == x.dtype

    # Plain-bias path (activate=False), default (large) batch tile.
    out2 = modulation_linear(x, z, weight, mod_weight, mod_bias, fused_bias,
                             demodulate=True, activate=False, add_bias=True)
    out2 = jax.block_until_ready(out2)
    ref2 = _reference(x, z, weight, mod_weight, mod_bias, fused_bias,
                      demodulate=True, activate=False, add_bias=True)
    np.testing.assert_allclose(np.asarray(out2), np.asarray(ref2),
                               rtol=2e-2, atol=2e-2)

    print("KERNEL_OK")
</pallas_src>

<mosaic_0001>
module attributes {stable_mosaic.version = 11 : i64} {
  func.func @_modulation_linear_kernel(%arg0: i32, %arg1: i32, %arg2: memref<32x128xf32, #tpu.memory_space<vmem>>, %arg3: memref<32x32xf32, #tpu.memory_space<vmem>>, %arg4: memref<32x128xbf16, #tpu.memory_space<vmem>>, %arg5: memref<1x128xf32, #tpu.memory_space<vmem>>, %arg6: memref<128x128xbf16, #tpu.memory_space<vmem>>, %arg7: memref<1x128xf32, #tpu.memory_space<vmem>>, %arg8: memref<32x128xf32, #tpu.memory_space<vmem>>) attributes {dimension_semantics = [#tpu.dimension_semantics<parallel>, #tpu.dimension_semantics<parallel>], iteration_bounds = array<i64: 1, 3>, scalar_prefetch = 0 : i64, scratch_operands = 0 : i64, tpu.core_type = #tpu.core_type<tc>, window_params = [{transform_indices = @transform_0, window_bounds = array<i64: 32, 128>}, {transform_indices = @transform_1, window_bounds = array<i64: 32, 32>}, {pipeline_mode = #tpu.pipeline_mode<synchronous>, transform_indices = @transform_2, window_bounds = array<i64: 32, 128>}, {pipeline_mode = #tpu.pipeline_mode<synchronous>, transform_indices = @transform_3, window_bounds = array<i64: 1, 128>}, {transform_indices = @transform_4, window_bounds = array<i64: 128, 128>}, {transform_indices = @transform_5, window_bounds = array<i64: 1, 128>}, {transform_indices = @transform_6, window_bounds = array<i64: 32, 128>}]} {
    %c0 = arith.constant 0 : index
    %c0_0 = arith.constant 0 : index
    %0 = vector.load %arg3[%c0, %c0_0] : memref<32x32xf32, #tpu.memory_space<vmem>>, vector<32x32xf32>
    %1 = arith.truncf %0 : vector<32x32xf32> to vector<32x32xbf16>
    %c0_1 = arith.constant 0 : index
    %c0_2 = arith.constant 0 : index
    %2 = vector.load %arg4[%c0_1, %c0_2] : memref<32x128xbf16, #tpu.memory_space<vmem>>, vector<32x128xbf16>
    %cst = arith.constant dense<0.000000e+00> : vector<32x128xf32>
    %3 = tpu.matmul %1, %2, %cst {dimension_numbers = #tpu.dot_dimension_numbers<[1], [0], [0], [1], [0, 0, 1, 1], [], []>} : vector<32x32xbf16>, vector<32x128xbf16>, vector<32x128xf32> -> vector<32x128xf32>
    %c0_3 = arith.constant 0 : index
    %c0_4 = arith.constant 0 : index
    %4 = vector.load %arg5[%c0_3, %c0_4] : memref<1x128xf32, #tpu.memory_space<vmem>>, vector<1x128xf32>
    %5 = vector.broadcast %4 : vector<1x128xf32> to vector<32x128xf32>
    %6 = arith.addf %3, %5 : vector<32x128xf32>
    %c0_5 = arith.constant 0 : index
    %c0_6 = arith.constant 0 : index
    %7 = vector.load %arg2[%c0_5, %c0_6] : memref<32x128xf32, #tpu.memory_space<vmem>>, vector<32x128xf32>
    %8 = arith.mulf %7, %6 : vector<32x128xf32>
    %9 = arith.mulf %8, %8 : vector<32x128xf32>
    %cst_7 = arith.constant dense<0.000000e+00> : vector<32xf32>
    %10 = vector.multi_reduction <add>, %9, %cst_7 [1] : vector<32x128xf32> to vector<32xf32>
    %11 = vector.shape_cast %10 : vector<32xf32> to vector<32x1xf32>
    %cst_8 = arith.constant 9.99999993E-9 : f32
    %12 = vector.broadcast %cst_8 : f32 to vector<32x1xf32>
    %13 = arith.addf %11, %12 : vector<32x1xf32>
    %14 = math.rsqrt %13 : vector<32x1xf32>
    %15 = vector.broadcast %14 : vector<32x1xf32> to vector<32x128xf32>
    %16 = arith.mulf %8, %15 : vector<32x128xf32>
    %17 = arith.truncf %16 : vector<32x128xf32> to vector<32x128xbf16>
    %c0_9 = arith.constant 0 : index
    %c0_10 = arith.constant 0 : index
    %18 = vector.load %arg6[%c0_9, %c0_10] : memref<128x128xbf16, #tpu.memory_space<vmem>>, vector<128x128xbf16>
    %cst_11 = arith.constant dense<0.000000e+00> : vector<32x128xf32>
    %19 = tpu.matmul %17, %18, %cst_11 {dimension_numbers = #tpu.dot_dimension_numbers<[1], [0], [0], [1], [0, 0, 1, 1], [], []>} : vector<32x128xbf16>, vector<128x128xbf16>, vector<32x128xf32> -> vector<32x128xf32>
    %c0_12 = arith.constant 0 : index
    %c0_13 = arith.constant 0 : index
    %20 = vector.load %arg7[%c0_12, %c0_13] : memref<1x128xf32, #tpu.memory_space<vmem>>, vector<1x128xf32>
    %21 = vector.broadcast %20 : vector<1x128xf32> to vector<32x128xf32>
    %22 = arith.addf %19, %21 : vector<32x128xf32>
    %cst_14 = arith.constant 0.000000e+00 : f32
    %23 = vector.broadcast %cst_14 : f32 to vector<32x128xf32>
    %24 = arith.cmpf oge, %22, %23 : vector<32x128xf32>
    %cst_15 = arith.constant 2.000000e-01 : f32
    %25 = vector.broadcast %cst_15 : f32 to vector<32x128xf32>
    %26 = arith.mulf %25, %22 : vector<32x128xf32>
    %27 = arith.select %24, %22, %26 : vector<32x128xi1>, vector<32x128xf32>
    %c0_16 = arith.constant 0 : index
    %c0_17 = arith.constant 0 : index
    %28 = vector.load %arg8[%c0_16, %c0_17] : memref<32x128xf32, #tpu.memory_space<vmem>>, vector<32x128xf32>
    tpu.vector_store %arg8[%c0_16, %c0_17], %27 {strides = array<i32>} : memref<32x128xf32, #tpu.memory_space<vmem>>, vector<32x128xf32>,
    return
  }
  func.func @transform_0(%arg0: i32, %arg1: i32) -> (i32, i32) {
    %c0_i32 = arith.constant 0 : i32
    %c0_i32_0 = arith.constant 0 : i32
    return %arg1, %c0_i32 : i32, i32
  }
  func.func @transform_1(%arg0: i32, %arg1: i32) -> (i32, i32) {
    %c0_i32 = arith.constant 0 : i32
    %c0_i32_0 = arith.constant 0 : i32
    return %arg1, %c0_i32 : i32, i32
  }
  func.func @transform_2(%arg0: i32, %arg1: i32) -> (i32, i32) {
    %c0_i32 = arith.constant 0 : i32
    %c0_i32_0 = arith.constant 0 : i32
    %c0_i32_1 = arith.constant 0 : i32
    return %c0_i32, %c0_i32_0 : i32, i32
  }
  func.func @transform_3(%arg0: i32, %arg1: i32) -> (i32, i32) {
    %c0_i32 = arith.constant 0 : i32
    %c0_i32_0 = arith.constant 0 : i32
    %c0_i32_1 = arith.constant 0 : i32
    return %c0_i32, %c0_i32_0 : i32, i32
  }
  func.func @transform_4(%arg0: i32, %arg1: i32) -> (i32, i32) {
    %c0_i32 = arith.constant 0 : i32
    %c0_i32_0 = arith.constant 0 : i32
    return %c0_i32, %arg0 : i32, i32
  }
  func.func @transform_5(%arg0: i32, %arg1: i32) -> (i32, i32) {
    %c0_i32 = arith.constant 0 : i32
    %c0_i32_0 = arith.constant 0 : i32
    return %c0_i32, %arg0 : i32, i32
  }
  func.func @transform_6(%arg0: i32, %arg1: i32) -> (i32, i32) {
    %c0_i32 = arith.constant 0 : i32
    return %arg1, %arg0 : i32, i32
  }
}

</mosaic_0001>

<llo_original>
// kernel: modulation_linear.1
$region0: #{modulation_linear.1}
  #allocation0 [shape = 'u32[]', space=smem, size = 0x4, offset = 0x4, fixed_abs, tag = 'smem constant byte address 0x4 - core index']
  #allocation1 [shape = 'u32[144,128]{1,0:T(1,128)}', space=vmem, size = 0x12000, scoped, tag = 'internal scratch']
  %s0 = inlined_call_operand.vmem [shape: f32[70,128], index: 0, kind: input, shape index: {}]
  %s1 = inlined_call_operand.vmem [shape: f32[70,32], index: 1, kind: input, shape index: {}]
  %s2 = inlined_call_operand.vmem [shape: bf16[32,128], index: 2, kind: input, shape index: {}]
  %s3 = inlined_call_operand.vmem [shape: f32[1,128], index: 3, kind: input, shape index: {}]
  %s4 = inlined_call_operand.vmem [shape: bf16[128,128], index: 4, kind: input, shape index: {}]
  %s5 = inlined_call_operand.vmem [shape: f32[1,128], index: 5, kind: input, shape index: {}]
  %s6 = inlined_call_operand.hbm [shape: f32[70,128], index: 6, kind: output, shape index: {}]
  %s7 = sld [smem:[#allocation0]]
  $region57: #{modulation_linear.1} parent=0
    _
  %s9 = ssub.s32 1, %s7
  %s10 = scalar_select 0, %s9, %s7
  $region1: #{modulation_linear.1} parent=0
    #allocation2 [shape = 'u8[32768]{0}', space=vmem, size = 0x8000, scoped, tag = 'output window, operand 0']
    #allocation3 [shape = 's32[2]{0}', space=sflag, size = 0x8, scoped, tag = 'scoped memory for modulation_linear.1']
    %11 = vsyncpa [#allocation3], 0
    %s12 = scalar_lea.sflag [#allocation3], 1
    %13 = vsyncpa %s12, 0
    loop: start=0, step=1, limit=5
    $region2: #{modulation_linear.1} parent=1 // loop_pre_header
      _
    $region3: #{modulation_linear.1} parent=1 // loop_header
      %s15 = sphi 0, %s19
      %p16 = scmp.ge.s32.totalorder %s15, 5
      %s22 = sphi 0, %s34
      %s23 = sphi 0, %s30
      %s24 = sphi 0, %s22
      %s25 = sphi 0, %s23
      %s26 = sphi 0, %s24
      %s27 = sphi 0, %s25
      %s37 = sphi 0, %s39
      %s40 = sphi 0, %s37
      %s41 = sphi 0, %s40
      %s57 = sphi 0, %s41
      %s63 = sphi 0, %s65
      %s66 = sphi 0, %s63
      %s67 = sphi 0, %s66
      %s83 = sphi 0, %s67
      %s87 = sphi 0, %s87
      %s89 = sphi 0, %s87
      %s90 = sphi 0, %s89
      %s104 = sphi 0, %s90
      %s108 = sphi 0, %s108
      %s110 = sphi 0, %s108
      %s111 = sphi 0, %s110
      %s125 = sphi 0, %s111
      %s131 = sphi 0, %s133
      %s134 = sphi 0, %s131
      %s135 = sphi 0, %s134
      %s151 = sphi 0, %s135
      %s157 = sphi 0, %s159
      %s160 = sphi 0, %s157
      %s161 = sphi 0, %s160
      %s177 = sphi 0, %s161
      %s185 = sphi 0, %s187
      %s188 = sphi 0, %s185
      %s189 = sphi 0, %s188
      %s205 = sphi 0, %s189
    $region4: #{modulation_linear.1} parent=1 // loop_header_branch
      %18 = sbr.rel (%p16) target = $region8
    $region5: #{modulation_linear.1} parent=1 // loop_body
      %s20 = ssub.s32 %s15, 1
      %s21 = ssub.s32 %s15, 2
      %s28 = sadd.s32 1, %s23
      %p29 = scmp.ge.s32.totalorder %s28, 3
      %s30 = scalar_select %p29, 0, %s28
      %s31 = sadd.s32 1, %s22
      %s32 = scalar_select %p29, %s31, %s22
      %p33 = scmp.ge.s32.totalorder %s32, 1
      %s34 = scalar_select %p33, 0, %s32
      %s35 = ssub.s32 %s23, %s30
      %p36 = scmp.eq.s32.totalorder %s35, 0
      %s38 = sadd.s32 %s37, 1
      %s39 = scalar_select %p36, %s37, %s38
      %p42 = pneg %p36
      %p43 = scmp.eq.s32.totalorder %s15, 2
      %p44 = por %p42, %p43
      %p45 = scmp.ne.s32.totalorder %s37, %s40
      %p46 = scmp.eq.s32.totalorder %s15, 0
      %p47 = por %p45, %p46
      %p48 = scmp.ne.s32.totalorder %s37, %s40
      %p49 = scmp.eq.s32.totalorder %s20, 2
      %p50 = por %p48, %p49
      %p51 = scmp.ne.s32.totalorder %s40, %s41
      %p52 = scmp.eq.s32.totalorder %s20, 0
      %p53 = por %p51, %p52
      %p54 = scmp.ne.s32.totalorder %s40, %s41
      %p55 = scmp.eq.s32.totalorder %s21, 2
      %p56 = por %p54, %p55
      %p58 = scmp.ne.s32.totalorder %s41, %s57
      %p59 = scmp.eq.s32.totalorder %s21, 0
      %p60 = por %p58, %p59
      %s61 = ssub.s32 %s23, %s30
      %p62 = scmp.eq.s32.totalorder %s61, 0
      %s64 = sadd.s32 %s63, 1
      %s65 = scalar_select %p62, %s63, %s64
      %p68 = pneg %p62
      %p69 = scmp.eq.s32.totalorder %s15, 2
      %p70 = por %p68, %p69
      %p71 = scmp.ne.s32.totalorder %s63, %s66
      %p72 = scmp.eq.s32.totalorder %s15, 0
      %p73 = por %p71, %p72
      %p74 = scmp.ne.s32.totalorder %s63, %s66
      %p75 = scmp.eq.s32.totalorder %s20, 2
      %p76 = por %p74, %p75
      %p77 = scmp.ne.s32.totalorder %s66, %s67
      %p78 = scmp.eq.s32.totalorder %s20, 0
      %p79 = por %p77, %p78
      %p80 = scmp.ne.s32.totalorder %s66, %s67
      %p81 = scmp.eq.s32.totalorder %s21, 2
      %p82 = por %p80, %p81
      %p84 = scmp.ne.s32.totalorder %s67, %s83
      %p85 = scmp.eq.s32.totalorder %s21, 0
      %p86 = por %p84, %p85
      %s88 = sadd.s32 %s87, 1
      %p91 = scmp.eq.s32.totalorder %s15, 2
      %p92 = scmp.ne.s32.totalorder %s87, %s89
      %p93 = scmp.eq.s32.totalorder %s15, 0
      %p94 = por %p92, %p93
      %p95 = scmp.ne.s32.totalorder %s87, %s89
      %p96 = scmp.eq.s32.totalorder %s20, 2
      %p97 = por %p95, %p96
      %p98 = scmp.ne.s32.totalorder %s89, %s90
      %p99 = scmp.eq.s32.totalorder %s20, 0
      %p100 = por %p98, %p99
      %p101 = scmp.ne.s32.totalorder %s89, %s90
      %p102 = scmp.eq.s32.totalorder %s21, 2
      %p103 = por %p101, %p102
      %p105 = scmp.ne.s32.totalorder %s90, %s104
      %p106 = scmp.eq.s32.totalorder %s21, 0
      %p107 = por %p105, %p106
      %s109 = sadd.s32 %s108, 1
      %p112 = scmp.eq.s32.totalorder %s15, 2
      %p113 = scmp.ne.s32.totalorder %s108, %s110
      %p114 = scmp.eq.s32.totalorder %s15, 0
      %p115 = por %p113, %p114
      %p116 = scmp.ne.s32.totalorder %s108, %s110
      %p117 = scmp.eq.s32.totalorder %s20, 2
      %p118 = por %p116, %p117
      %p119 = scmp.ne.s32.totalorder %s110, %s111
      %p120 = scmp.eq.s32.totalorder %s20, 0
      %p121 = por %p119, %p120
      %p122 = scmp.ne.s32.totalorder %s110, %s111
      %p123 = scmp.eq.s32.totalorder %s21, 2
      %p124 = por %p122, %p123
      %p126 = scmp.ne.s32.totalorder %s111, %s125
      %p127 = scmp.eq.s32.totalorder %s21, 0
      %p128 = por %p126, %p127
      %s129 = ssub.s32 %s22, %s34
      %p130 = scmp.eq.s32.totalorder %s129, 0
      %s132 = sadd.s32 %s131, 1
      %s133 = scalar_select %p130, %s131, %s132
      %p136 = pneg %p130
      %p137 = scmp.eq.s32.totalorder %s15, 2
      %p138 = por %p136, %p137
      %p139 = scmp.ne.s32.totalorder %s131, %s134
      %p140 = scmp.eq.s32.totalorder %s15, 0
      %p141 = por %p139, %p140
      %p142 = scmp.ne.s32.totalorder %s131, %s134
      %p143 = scmp.eq.s32.totalorder %s20, 2
      %p144 = por %p142, %p143
      %p145 = scmp.ne.s32.totalorder %s134, %s135
      %p146 = scmp.eq.s32.totalorder %s20, 0
      %p147 = por %p145, %p146
      %p148 = scmp.ne.s32.totalorder %s134, %s135
      %p149 = scmp.eq.s32.totalorder %s21, 2
      %p150 = por %p148, %p149
      %p152 = scmp.ne.s32.totalorder %s135, %s151
      %p153 = scmp.eq.s32.totalorder %s21, 0
      %p154 = por %p152, %p153
      %s155 = ssub.s32 %s22, %s34
      %p156 = scmp.eq.s32.totalorder %s155, 0
      %s158 = sadd.s32 %s157, 1
      %s159 = scalar_select %p156, %s157, %s158
      %p162 = pneg %p156
      %p163 = scmp.eq.s32.totalorder %s15, 2
      %p164 = por %p162, %p163
      %p165 = scmp.ne.s32.totalorder %s157, %s160
      %p166 = scmp.eq.s32.totalorder %s15, 0
      %p167 = por %p165, %p166
      %p168 = scmp.ne.s32.totalorder %s157, %s160
      %p169 = scmp.eq.s32.totalorder %s20, 2
      %p170 = por %p168, %p169
      %p171 = scmp.ne.s32.totalorder %s160, %s161
      %p172 = scmp.eq.s32.totalorder %s20, 0
      %p173 = por %p171, %p172
      %p174 = scmp.ne.s32.totalorder %s160, %s161
      %p175 = scmp.eq.s32.totalorder %s21, 2
      %p176 = por %p174, %p175
      %p178 = scmp.ne.s32.totalorder %s161, %s177
      %p179 = scmp.eq.s32.totalorder %s21, 0
      %p180 = por %p178, %p179
      %s181 = ssub.s32 %s23, %s30
      %s182 = ssub.s32 %s22, %s34
      %s183 = sor.u32 %s181, %s182
      %p184 = scmp.eq.s32.totalorder %s183, 0
      %s186 = sadd.s32 %s185, 1
      %s187 = scalar_select %p184, %s185, %s186
      %p190 = pneg %p184
      %p191 = scmp.eq.s32.totalorder %s15, 2
      %p192 = por %p190, %p191
      %p193 = scmp.ne.s32.totalorder %s185, %s188
      %p194 = scmp.eq.s32.totalorder %s15, 0
      %p195 = por %p193, %p194
      %p196 = scmp.ne.s32.totalorder %s185, %s188
      %p197 = scmp.eq.s32.totalorder %s20, 2
      %p198 = por %p196, %p197
      %p199 = scmp.ne.s32.totalorder %s188, %s189
      %p200 = scmp.eq.s32.totalorder %s20, 0
      %p201 = por %p199, %p200
      %p202 = scmp.ne.s32.totalorder %s188, %s189
      %p203 = scmp.eq.s32.totalorder %s21, 2
      %p204 = por %p202, %p203
      %p206 = scmp.ne.s32.totalorder %s189, %s205
      %p207 = scmp.eq.s32.totalorder %s21, 0
      %p208 = por %p206, %p207
      %p209 = scmp.le.s32.totalorder 1, %s15
      %p210 = scmp.lt.s32.totalorder %s15, 4
      %p211 = pnand %p209, %p210
      %p212 = pneg %p211
      // Predicated region
      $region9: #{modulation_linear.1} parent=5 // pred_check
        _
      $region10: #{modulation_linear.1} parent=5 // pred_check_branch
        %214 = sbr.rel (%p211) target = $region12
      $region11: #{modulation_linear.1} parent=5 // pred_region
        %s215 = ssub.s32 %s15, 1
        // Predicated region
        $region13: #{modulation_linear.1} parent=11 // pred_check
          %p216 = pneg %p100
        $region14: #{modulation_linear.1} parent=11 // pred_check_branch
          %218 = sbr.rel (%p216) target = $region16
        $region15: #{modulation_linear.1} parent=11 // pred_region
          _
        $region16: #{modulation_linear.1} parent=11 // pred_fallthru
          _
        // Predicated region
        $region17: #{modulation_linear.1} parent=11 // pred_check
          %p219 = pneg %p121
        $region18: #{modulation_linear.1} parent=11 // pred_check_branch
          %221 = sbr.rel (%p219) target = $region20
        $region19: #{modulation_linear.1} parent=11 // pred_region
          _
        $region20: #{modulation_linear.1} parent=11 // pred_fallthru
          _
        // Predicated region
        $region21: #{modulation_linear.1} parent=11 // pred_check
          %p222 = pneg %p147
        $region22: #{modulation_linear.1} parent=11 // pred_check_branch
          %224 = sbr.rel (%p222) target = $region24
        $region23: #{modulation_linear.1} parent=11 // pred_region
          %p225 = scmp.lt.s32.totalorder %s24, 0
          %s226 = scalar_select %p225, %s24, 0
          %s227 = smul.addr %s226, 4
          %s228 = scalar_lea.vmem %s4, %s227
        $region24: #{modulation_linear.1} parent=11 // pred_fallthru
          _
        // Predicated region
        $region25: #{modulation_linear.1} parent=11 // pred_check
          %p229 = pneg %p173
        $region26: #{modulation_linear.1} parent=11 // pred_check_branch
          %231 = sbr.rel (%p229) target = $region28
        $region27: #{modulation_linear.1} parent=11 // pred_region
          %p232 = scmp.lt.s32.totalorder %s24, 0
          %s233 = scalar_select %p232, %s24, 0
          %s234 = scalar_lea.vmem %s5, %s233
        $region28: #{modulation_linear.1} parent=11 // pred_fallthru
          _
      $region12: #{modulation_linear.1} parent=5 // pred_fallthru
        _
      %p235 = scmp.lt.s32.totalorder %s15, 3
      // Predicated region
      $region29: #{modulation_linear.1} parent=5 // pred_check
        %p236 = pneg %p235
      $region30: #{modulation_linear.1} parent=5 // pred_check_branch
        %238 = sbr.rel (%p236) target = $region32
      $region31: #{modulation_linear.1} parent=5 // pred_region
        // Predicated region
        $region33: #{modulation_linear.1} parent=31 // pred_check
          %p239 = pneg %p47
        $region34: #{modulation_linear.1} parent=31 // pred_check_branch
          %241 = sbr.rel (%p239) target = $region36
        $region35: #{modulation_linear.1} parent=31 // pred_region
          %s242 = smul.u32 4, %s23
          %s243 = ssub.s32 9, %s242
          %p244 = scmp.lt.s32.totalorder %s243, 4
          %s245 = scalar_select %p244, %s243, 4
          %s246 = smul.u32 128, %s245
          %p247 = scmp.lt.s32.totalorder %s242, 8
          %s248 = scalar_select %p247, %s242, 8
          %s249 = smul.addr %s248, 8
          %s250 = scalar_lea.vmem %s0, %s249
          %s251 = smul.u32 4, %s23
          %s252 = ssub.s32 9, %s251
          %p253 = scmp.lt.s32.totalorder %s252, 4
          %s254 = scalar_select %p253, %s252, 4
          %s255 = smul.u32 128, %s254
        $region36: #{modulation_linear.1} parent=31 // pred_fallthru
          _
        // Predicated region
        $region37: #{modulation_linear.1} parent=31 // pred_check
          %p256 = pneg %p73
        $region38: #{modulation_linear.1} parent=31 // pred_check_branch
          %258 = sbr.rel (%p256) target = $region40
        $region39: #{modulation_linear.1} parent=31 // pred_region
          %s259 = smul.u32 4, %s23
          %s260 = ssub.s32 9, %s259
          %p261 = scmp.lt.s32.totalorder %s260, 4
          %s262 = scalar_select %p261, %s260, 4
          %s263 = smul.u32 128, %s262
          %p264 = scmp.lt.s32.totalorder %s259, 8
          %s265 = scalar_select %p264, %s259, 8
          %s266 = smul.addr %s265, 8
          %s267 = scalar_lea.vmem %s1, %s266
          %s268 = smul.u32 4, %s23
          %s269 = ssub.s32 9, %s268
          %p270 = scmp.lt.s32.totalorder %s269, 4
          %s271 = scalar_select %p270, %s269, 4
          %s272 = smul.u32 128, %s271
        $region40: #{modulation_linear.1} parent=31 // pred_fallthru
          _
      $region32: #{modulation_linear.1} parent=5 // pred_fallthru
        _
      %p273 = scmp.le.s32.totalorder 1, %s15
      %p274 = scmp.lt.s32.totalorder %s15, 4
      %p275 = pnand %p273, %p274
      %p276 = pneg %p275
      // Predicated region
      $region41: #{modulation_linear.1} parent=5 // pred_check
        _
      $region42: #{modulation_linear.1} parent=5 // pred_check_branch
        %278 = sbr.rel (%p275) target = $region44
      $region43: #{modulation_linear.1} parent=5 // pred_region
        %s279 = ssub.s32 %s15, 1
        %s280 = smul.u32 4, %s25
        %s281 = ssub.s32 9, %s280
        %p282 = scmp.lt.s32.totalorder %s281, 4
        %s283 = scalar_select %p282, %s281, 4
        %s284 = smul.u32 128, %s283
        %p285 = scmp.lt.s32.totalorder %s280, 8
        %s286 = scalar_select %p285, %s280, 8
        %s287 = smul.addr %s286, 8
        %s288 = scalar_lea.vmem %s0, %s287
        %p289 = pneg %p53
        %p290 = pneg %p50
        %s291 = smul.u32 4, %s25
        %s292 = ssub.s32 9, %s291
        %p293 = scmp.lt.s32.totalorder %s292, 4
        %s294 = scalar_select %p293, %s292, 4
        %s295 = smul.u32 128, %s294
        %p296 = scmp.lt.s32.totalorder %s291, 8
        %s297 = scalar_select %p296, %s291, 8
        %s298 = smul.addr %s297, 8
        %s299 = scalar_lea.vmem %s1, %s298
        %p300 = pneg %p79
        %p301 = pneg %p76
        %p302 = pneg %p100
        %p303 = pneg %p97
        %p304 = pneg %p121
        %p305 = pneg %p118
        %p306 = scmp.lt.s32.totalorder %s24, 0
        %s307 = scalar_select %p306, %s24, 0
        %s308 = smul.addr %s307, 4
        %s309 = scalar_lea.vmem %s4, %s308
        %p310 = pneg %p147
        %p311 = pneg %p144
        %p312 = scmp.lt.s32.totalorder %s24, 0
        %s313 = scalar_select %p312, %s24, 0
        %s314 = scalar_lea.vmem %s5, %s313
        %p315 = pneg %p173
        %p316 = pneg %p170
        %p317 = pneg %p201
        %p318 = pneg %p198
        %s319 = sand.u32 %s188, 1
        %s320 = scalar_lea.sflag [#allocation3], %s319
        %s321 = sand.u32 %s188, 1
        %s322 = smul.addr %s321, 32
        %s323 = scalar_lea.vmem [#allocation2], %s322
        %s324 = smul.u32 4, %s25
        %s325 = ssub.s32 9, %s324
        %p326 = scmp.lt.s32.totalorder %s325, 4
        %s327 = scalar_select %p326, %s325, 4
        %s328 = smul.u32 128, %s327
        %p329 = scmp.lt.s32.totalorder %s324, 8
        %s330 = scalar_select %p329, %s324, 8
        %s331 = smul.addr %s330, 8
        %s332 = scalar_lea.vmem %s0, %s331
        %s333 = smul.u32 4, %s25
        %s334 = ssub.s32 9, %s333
        %p335 = scmp.lt.s32.totalorder %s334, 4
        %s336 = scalar_select %p335, %s334, 4
        %s337 = smul.u32 128, %s336
        %s338 = smul.u32 4, %s25
        %s339 = ssub.s32 9, %s338
        %p340 = scmp.lt.s32.totalorder %s339, 4
        %s341 = scalar_select %p340, %s339, 4
        %s342 = smul.u32 128, %s341
        %p343 = scmp.lt.s32.totalorder %s338, 8
        %s344 = scalar_select %p343, %s338, 8
        %s345 = smul.addr %s344, 8
        %s346 = scalar_lea.vmem %s1, %s345
        %s347 = smul.u32 4, %s25
        %s348 = ssub.s32 9, %s347
        %p349 = scmp.lt.s32.totalorder %s348, 4
        %s350 = scalar_select %p349, %s348, 4
        %s351 = smul.u32 128, %s350
        %p352 = scmp.lt.s32.totalorder %s24, 0
        %s353 = scalar_select %p352, %s24, 0
        %s354 = smul.addr %s353, 4
        %s355 = scalar_lea.vmem %s4, %s354
        %p356 = scmp.lt.s32.totalorder %s24, 0
        %s357 = scalar_select %p356, %s24, 0
        %s358 = scalar_lea.vmem %s5, %s357
        %s359 = smul.u32 4, %s25
        %s360 = ssub.s32 9, %s359
        %p361 = scmp.lt.s32.totalorder %s360, 4
        %s362 = scalar_select %p361, %s360, 4
        %s363 = smul.u32 128, %s362
        %v365 = vld [vmem:[%s346] sm:$0xff]
        %v366 = vld [vmem:[%s346 + $0x8] sm:$0xff]
        %v367 = vld [vmem:[%s346 + $0x10] sm:$0xff]
        %v368 = vld [vmem:[%s346 + $0x18] sm:$0xff]
        %v369 = vpack.c.bf16 %v366, %v365
        %v370 = vpack.c.bf16 %v368, %v367
        %v371 = vld [vmem:[%s2] sm:$0xf]
        %v372 = vld [vmem:[%s2 + $0x4] sm:$0xf]
        %v373 = vld [vmem:[%s2 + $0x8] sm:$0xf]
        %v374 = vld [vmem:[%s2 + $0xc] sm:$0xf]
        %v375 = vld [vmem:[%s3] sm:$0x1]
        %v377 = vlaneseq
        %v378 = vshrl.u32 %v377, 7
        %v379 = vsub.s32 0, %v378
        %v380 = vrot.slane %v375, %v379
        %v386 = vunpack.c.l.b16 %v371
        %v387 = vunpack.c.l.b16 %v372
        %v388 = vunpack.c.l.b16 %v373
        %v389 = vunpack.c.l.b16 %v374
        %v390 = vpack.c.b16 %v387, %v386
        %v391 = vpack.c.b16 %v389, %v388
        %vm394 = vcmask 261120
        %v396 = vsel %vm394, %v369, 0
        %v399 = vsel %vm394, %v370, 0
        %401 = vmatprep.subr.bf16.mxu0 0
        %402 = vmatpush1.bf16.msra.mxu0 %v390
        %403 = vmatprep.subr.bf16.mxu0 0
        %404 = vmatpush1.bf16.msra.mxu0 %v391
        %405 = vmatprep.subr.bf16.mxu0 0
        %406 = vmatpush1.bf16.msra.mxu0 0
        %407 = vmatprep.subr.bf16.mxu0 0
        %408 = vmatpush1.bf16.msra.mxu0 0
        %409 = vmatprep.subr.bf16.mxu0 0
        %410 = vmatpush1.bf16.msra.mxu0 0
        %411 = vmatprep.subr.bf16.mxu0 0
        %412 = vmatpush1.bf16.msra.mxu0 0
        %413 = vmatprep.subr.bf16.mxu0 0
        %414 = vmatpush1.bf16.msra.mxu0 0
        %415 = vmatprep.subr.bf16.mxu0 0
        %416 = vmatpush1.bf16.msra.mxu0 0
        %417 = vmatprep.subr.bf16.mxu0 0
        %418 = vmatpush1.bf16.msra.mxu0 0
        %419 = vmatprep.subr.bf16.mxu0 0
        %420 = vmatpush1.bf16.msra.mxu0 0
        %421 = vmatprep.subr.bf16.mxu0 0
        %422 = vmatpush1.bf16.msra.mxu0 0
        %423 = vmatprep.subr.bf16.mxu0 0
        %424 = vmatpush1.bf16.msra.mxu0 0
        %425 = vmatprep.subr.bf16.mxu0 0
        %426 = vmatpush1.bf16.msra.mxu0 0
        %427 = vmatprep.subr.bf16.mxu0 0
        %428 = vmatpush1.bf16.msra.mxu0 0
        %429 = vmatprep.subr.bf16.mxu0 0
        %430 = vmatpush1.bf16.msra.mxu0 0
        %431 = vmatprep.subr.bf16.mxu0 0
        %432 = vmatpush1.bf16.msra.mxu0 0
        %433 = vmatprep.mubr.bf16.mxu0 0
        %434 = vmatmul.mubr.bf16.gmra.mrb[0].mxu0 %v396
        %v435 = vpop.f32.mrb[0].mxu0
        %v436 = vadd.f32 %v380, %v435
        %v437 = vpop.f32.mrb[0].mxu0
        %v438 = vpop.f32.mrb[0].mxu0
        %v439 = vadd.f32 %v380, %v438
        %v440 = vpop.f32.mrb[0].mxu0
        %441 = vmatprep.mubr.bf16.mxu0 0
        %442 = vmatmul.mubr.bf16.gmra.mrb[0].mxu0 %v399
        %v443 = vpop.f32.mrb[0].mxu0
        %v444 = vadd.f32 %v380, %v443
        %v445 = vpop.f32.mrb[0].mxu0
        %v446 = vpop.f32.mrb[0].mxu0
        %v447 = vadd.f32 %v380, %v446
        %v448 = vpop.f32.mrb[0].mxu0
        %449 = vdwg.mxu0
        %v450 = vld [vmem:[%s332] sm:$0xff]
        %v451 = vld [vmem:[%s332 + $0x8] sm:$0xff]
        %v452 = vld [vmem:[%s332 + $0x10] sm:$0xff]
        %v453 = vld [vmem:[%s332 + $0x18] sm:$0xff]
        %v454 = vmul.f32 %v450, %v436
        %v455 = vmul.f32 %v451, %v439
        %v456 = vmul.f32 %v452, %v444
        %v457 = vmul.f32 %v453, %v447
        %v458 = vmul.f32 %v454, %v454
        %v459 = vmul.f32 %v455, %v455
        %v460 = vmul.f32 %v456, %v456
        %v461 = vmul.f32 %v457, %v457
        %462 = vadd.xlane.f32.xlu0 %v458
        %v463 = vpop.xlane.xlu0 %462
        %464 = vadd.xlane.f32.xlu0 %v459
        %v465 = vpop.xlane.xlu0 %464
        %466 = vadd.xlane.f32.xlu0 %v460
        %v467 = vpop.xlane.xlu0 %466
        %468 = vadd.xlane.f32.xlu0 %v461
        %v469 = vpop.xlane.xlu0 %468
        %v470 = vadd.f32 %v463, 1e-08
        %v471 = vadd.f32 %v465, 1e-08
        %v472 = vadd.f32 %v467, 1e-08
        %v473 = vadd.f32 %v469, 1e-08
        %v474 = vrsqrt.pop %v470
        %v475 = vrsqrt.pop %v471
        %v476 = vrsqrt.pop %v472
        %v477 = vrsqrt.pop %v473
        %v478 = vmul.f32 %v454, %v474
        %v479 = vmul.f32 %v455, %v475
        %v480 = vmul.f32 %v456, %v476
        %v481 = vmul.f32 %v457, %v477
        %v482 = vpack.c.bf16 %v479, %v478
        %v483 = vpack.c.bf16 %v481, %v480
        %v484 = vld [vmem:[%s355] sm:$0xf]
        %v485 = vld [vmem:[%s355 + $0x4] sm:$0xf]
        %v486 = vld [vmem:[%s355 + $0x8] sm:$0xf]
        %v487 = vld [vmem:[%s355 + $0xc] sm:$0xf]
        %v488 = vld [vmem:[%s355 + $0x10] sm:$0xf]
        %v489 = vld [vmem:[%s355 + $0x14] sm:$0xf]
        %v490 = vld [vmem:[%s355 + $0x18] sm:$0xf]
        %v491 = vld [vmem:[%s355 + $0x1c] sm:$0xf]
        %v492 = vld [vmem:[%s355 + $0x20] sm:$0xf]
        %v493 = vld [vmem:[%s355 + $0x24] sm:$0xf]
        %v494 = vld [vmem:[%s355 + $0x28] sm:$0xf]
        %v495 = vld [vmem:[%s355 + $0x2c] sm:$0xf]
        %v496 = vld [vmem:[%s355 + $0x30] sm:$0xf]
        %v497 = vld [vmem:[%s355 + $0x34] sm:$0xf]
        %v498 = vld [vmem:[%s355 + $0x38] sm:$0xf]
        %v499 = vld [vmem:[%s355 + $0x3c] sm:$0xf]
        %v500 = vld [vmem:[%s358] sm:$0x1]
        %v502 = vlaneseq
        %v503 = vshrl.u32 %v502, 7
        %v504 = vsub.s32 0, %v503
        %v505 = vrot.slane %v500, %v504
        %v523 = vunpack.c.l.b16 %v484
        %v524 = vunpack.c.l.b16 %v485
        %v525 = vunpack.c.l.b16 %v486
        %v526 = vunpack.c.l.b16 %v487
        %v527 = vunpack.c.l.b16 %v488
        %v528 = vunpack.c.l.b16 %v489
        %v529 = vunpack.c.l.b16 %v490
        %v530 = vunpack.c.l.b16 %v491
        %v531 = vunpack.c.l.b16 %v492
        %v532 = vunpack.c.l.b16 %v493
        %v533 = vunpack.c.l.b16 %v494
        %v534 = vunpack.c.l.b16 %v495
        %v535 = vunpack.c.l.b16 %v496
        %v536 = vunpack.c.l.b16 %v497
        %v537 = vunpack.c.l.b16 %v498
        %v538 = vunpack.c.l.b16 %v499
        %v539 = vpack.c.b16 %v524, %v523
        %v540 = vpack.c.b16 %v526, %v525
        %v541 = vpack.c.b16 %v528, %v527
        %v542 = vpack.c.b16 %v530, %v529
        %v543 = vpack.c.b16 %v532, %v531
        %v544 = vpack.c.b16 %v534, %v533
        %v545 = vpack.c.b16 %v536, %v535
        %v546 = vpack.c.b16 %v538, %v537
        %555 = vmatprep.subr.bf16.mxu0 0
        %556 = vmatpush1.bf16.msra.mxu0 %v539
        %557 = vmatprep.subr.bf16.mxu0 0
        %558 = vmatpush1.bf16.msra.mxu0 %v540
        %559 = vmatprep.subr.bf16.mxu0 0
        %560 = vmatpush1.bf16.msra.mxu0 %v541
        %561 = vmatprep.subr.bf16.mxu0 0
        %562 = vmatpush1.bf16.msra.mxu0 %v542
        %563 = vmatprep.subr.bf16.mxu0 0
        %564 = vmatpush1.bf16.msra.mxu0 %v543
        %565 = vmatprep.subr.bf16.mxu0 0
        %566 = vmatpush1.bf16.msra.mxu0 %v544
        %567 = vmatprep.subr.bf16.mxu0 0
        %568 = vmatpush1.bf16.msra.mxu0 %v545
        %569 = vmatprep.subr.bf16.mxu0 0
        %570 = vmatpush1.bf16.msra.mxu0 %v546
        %571 = vmatprep.subr.bf16.mxu0 0
        %572 = vmatpush1.bf16.msra.mxu0 0
        %573 = vmatprep.subr.bf16.mxu0 0
        %574 = vmatpush1.bf16.msra.mxu0 0
        %575 = vmatprep.subr.bf16.mxu0 0
        %576 = vmatpush1.bf16.msra.mxu0 0
        %577 = vmatprep.subr.bf16.mxu0 0
        %578 = vmatpush1.bf16.msra.mxu0 0
        %579 = vmatprep.subr.bf16.mxu0 0
        %580 = vmatpush1.bf16.msra.mxu0 0
        %581 = vmatprep.subr.bf16.mxu0 0
        %582 = vmatpush1.bf16.msra.mxu0 0
        %583 = vmatprep.subr.bf16.mxu0 0
        %584 = vmatpush1.bf16.msra.mxu0 0
        %585 = vmatprep.subr.bf16.mxu0 0
        %586 = vmatpush1.bf16.msra.mxu0 0
        %587 = vmatprep.mubr.bf16.mxu0 0
        %588 = vmatmul.mubr.bf16.gmra.mrb[0].mxu0 %v482
        %v589 = vpop.f32.mrb[0].mxu0
        %v590 = vadd.f32 %v505, %v589
        %v591 = vpop.f32.mrb[0].mxu0
        %v592 = vpop.f32.mrb[0].mxu0
        %v593 = vadd.f32 %v505, %v592
        %v594 = vpop.f32.mrb[0].mxu0
        %595 = vmatprep.mubr.bf16.mxu0 0
        %596 = vmatmul.mubr.bf16.gmra.mrb[0].mxu0 %v483
        %v597 = vpop.f32.mrb[0].mxu0
        %v598 = vadd.f32 %v505, %v597
        %v599 = vpop.f32.mrb[0].mxu0
        %v600 = vpop.f32.mrb[0].mxu0
        %v601 = vadd.f32 %v505, %v600
        %v602 = vpop.f32.mrb[0].mxu0
        %603 = vdwg.mxu0
        %vm604 = vcmp.ge.f32.partialorder %v590, 0.0
        %vm605 = vcmp.ge.f32.partialorder %v593, 0.0
        %vm606 = vcmp.ge.f32.partialorder %v598, 0.0
        %vm607 = vcmp.ge.f32.partialorder %v601, 0.0
        %v608 = vmul.f32 %v590, 0.2
        %v609 = vmul.f32 %v593, 0.2
        %v610 = vmul.f32 %v598, 0.2
        %v611 = vmul.f32 %v601, 0.2
        %v612 = vsel %vm604, %v590, %v608
        %v613 = vsel %vm605, %v593, %v609
        %v614 = vsel %vm606, %v598, %v610
        %v615 = vsel %vm607, %v601, %v611
        %616 = vst [vmem:[%s323] sm:$0xff] %v612
        %617 = vst [vmem:[%s323 + $0x8] sm:$0xff] %v613
        %618 = vst [vmem:[%s323 + $0x10] sm:$0xff] %v614
        %619 = vst [vmem:[%s323 + $0x18] sm:$0xff] %v615
        %s620 = sand.u32 %s188, 1
        %s621 = scalar_lea.sflag [#allocation3], %s620
        %s622 = sand.u32 %s188, 1
        %s623 = smul.addr %s622, 32
        %s624 = scalar_lea.vmem [#allocation2], %s623
        // Predicated region
        $region45: #{modulation_linear.1} parent=43 // pred_check
          %p625 = pneg %p198
        $region46: #{modulation_linear.1} parent=43 // pred_check_branch
          %627 = sbr.rel (%p625) target = $region48
        $region47: #{modulation_linear.1} parent=43 // pred_region
          %s628 = smul.u32 4, %s25
          %s629 = ssub.s32 9, %s628
          %p630 = scmp.lt.s32.totalorder %s629, 4
          %s631 = scalar_select %p630, %s629, 4
          %s632 = smul.u32 128, %s631
          %s634 = ssub.s32 512, %s632
          %635 = vsyncadd %s621, %s634
          %p636 = scmp.ne.s32.totalorder 0, %s632
          %s637 = sadd.s32 %s24, %s628
          %s638 = smul.addr %s637, 128
          %s639 = scalar_lea.hbm %s6, %s638
          %s640 = smul.u32 8, %s631
          %s641 = sshll.u32 %s624, 4
          %s642 = int_to_ptr.vmem [resolvable:$true] %s641
          %s643 = sshll.u32 %s640, 4
          %647 = dma.vmem_to_hbm [thread:$0]  (%p636), %s642, %s643, %s639, %s621, 128, 128, 8
        $region48: #{modulation_linear.1} parent=43 // pred_fallthru
          _
      $region44: #{modulation_linear.1} parent=5 // pred_fallthru
        _
      %p648 = scmp.le.s32.totalorder 2, %s15
      // Predicated region
      $region49: #{modulation_linear.1} parent=5 // pred_check
        %p649 = pneg %p648
      $region50: #{modulation_linear.1} parent=5 // pred_check_branch
        %651 = sbr.rel (%p649) target = $region52
      $region51: #{modulation_linear.1} parent=5 // pred_region
        %s652 = ssub.s32 %s15, 2
        // Predicated region
        $region53: #{modulation_linear.1} parent=51 // pred_check
          %p653 = pneg %p204
        $region54: #{modulation_linear.1} parent=51 // pred_check_branch
          %655 = sbr.rel (%p653) target = $region56
        $region55: #{modulation_linear.1} parent=51 // pred_region
          %s656 = sand.u32 %s189, 1
          %s657 = scalar_lea.sflag [#allocation3], %s656
          %s658 = sand.u32 %s189, 1
          %s659 = smul.addr %s658, 32
          %s660 = scalar_lea.vmem [#allocation2], %s659
          %661 = dma.done %s657, 512
        $region56: #{modulation_linear.1} parent=51 // pred_fallthru
          _
      $region52: #{modulation_linear.1} parent=5 // pred_fallthru
        _
    $region6: #{modulation_linear.1} parent=1 // loop_footer
      %s19 = sadd.s32 1, %s15
    $region7: #{modulation_linear.1} parent=1 // loop_footer_branch
      %14 = sbr.rel target = $region3
    $region8: #{modulation_linear.1} parent=1 // loop_exit
      _
    %662 = vsyncpa [#allocation3], 1
    %s663 = scalar_lea.sflag [#allocation3], 1
    %664 = vsyncpa %s663, 1

</llo_original>
